<compile_context>
chip_gen: v6e
topology: v6e:2x2x1
jax: 0.10.0
libtpu: 0.0.40
codegen_flags: <defaults>
</compile_context>

<pallas_src>
import jax
import jax.numpy as jnp
from jax.experimental import pallas as pl
from jax.experimental.pallas import tpu as pltpu

LANE = 128       # hidden / logits slab width (lane-dense)
SUB = 8          # sublane width — batch is padded to a multiple of this
NEG = -1e30      # bias for padded logit lanes (never win the log-softmax)
TT_MAX = 16      # max timesteps handled per grid step (unrolled in-kernel)


def make_rnn_kernel(*, C, I, B, Tt, T_real, T_pad):
    """Build the time-blocked RNN kernel (all sizes are compile-time consts)."""
    mask_tail = (T_pad != T_real)

    def kernel(cat_ref, inp_ref, h0_ref, w_ref, b_ref,
               out_ref, hlast_ref, hid, catproj):
        # cat_ref  : (B, C)            per-batch-block category (resident)
        # inp_ref  : (Tt, B, I)        time tile of inputs       (streams)
        # h0_ref   : (B, LANE)         initial hidden slab       (resident)
        # w_ref    : (C+I+LANE, 2*LANE) fused weight             (resident)
        # b_ref    : (1, 2*LANE)       fused bias                (resident)
        # out_ref  : (Tt, B, LANE)     time tile of log-probs    (streams out)
        # hlast_ref: (B, LANE)         final hidden slab (written once)
        # hid      : (B, LANE)  VMEM scratch — carried hidden state
        # catproj  : (B, 2*LANE) VMEM scratch — category proj + bias (const/T)
        tb = pl.program_id(1)          # time-block index (serial axis)

        # -- once per batch block: init hidden, fold category + bias --------
        @pl.when(tb == 0)
        def _():
            hid[...] = h0_ref[...]
            catproj[...] = (
                jnp.dot(cat_ref[...], w_ref[:C, :],
                        preferred_element_type=jnp.float32)
                + b_ref[...])

        # -- batched, non-recurrent work for the whole time tile ------------
        # input projection for every step at once: (Tt*B, I) @ (I, 2*LANE)
        x_flat = inp_ref[...].reshape(Tt * B, I)
        pre = jnp.dot(x_flat, w_ref[C:C + I, :],
                      preferred_element_type=jnp.float32)
        pre = pre.reshape(Tt, B, 2 * LANE) + catproj[...][None, :, :]
        pre_h = pre[:, :, :LANE]        # per-step hidden pre-activation
        pre_o = pre[:, :, LANE:]        # per-step (folded o2o) logit pre-act

        w_hh = w_ref[C + I:, :LANE]     # (LANE, LANE) recurrent weight

        # -- serial recurrence: ONLY hid @ W_hh stays on the critical path --
        h = hid[...]
        h_in = []                       # hidden ENTERING each step (h_{t-1})
        for s in range(Tt):             # static unroll, Tt <= 16
            h_in.append(h)
            h_new = pre_h[s] + jnp.dot(h, w_hh,
                                       preferred_element_type=jnp.float32)
            if mask_tail:
                # padded tail timesteps must not advance the hidden state
                h = jnp.where(tb * Tt + s < T_real, h_new, h)
            else:
                h = h_new
        hid[...] = h

        # -- batched logits + log-softmax for the whole tile ----------------
        h_prev = jnp.concatenate(h_in, axis=0)              # (Tt*B, LANE)
        logits = (pre_o.reshape(Tt * B, LANE)
                  + jnp.dot(h_prev, w_ref[C + I:, LANE:],
                            preferred_element_type=jnp.float32))
        m = jnp.max(logits, axis=1, keepdims=True)          # padded lanes=NEG
        shifted = logits - m
        lse = jnp.log(jnp.sum(jnp.exp(shifted), axis=1, keepdims=True))
        out_ref[...] = (shifted - lse).reshape(Tt, B, LANE)

        # -- final hidden: single gated writeback on the last time block ----
        @pl.when(tb == pl.num_programs(1) - 1)
        def _():
            hlast_ref[...] = hid[...]

        # TODO(synk): training-mode dropout(p=0.1) between o2o and log-softmax
        # is not implemented (eval-mode identity assumed; it is also what
        # makes the host-side o2o pre-folding valid).

    return kernel


def fold_params(w_i2h, b_i2h, w_i2o, b_i2o, w_o2o, b_o2o,
                n_categories, input_size, hidden_size, output_size):
    """Host-side, once: fold o2o into i2h/i2o and lay everything out as one
    lane-dense fused weight / bias pair.

    Weight row layout   : [category (C) | input (I) | hidden slab (LANE)]
    Weight column layout: [hidden slab (LANE)       | logits slab (LANE)]
    Rows >= C+I+H and hidden columns >= H are zero; padded logit-lane biases
    are NEG so they never win the log-softmax.
    """
    C, I, H, O = n_categories, input_size, hidden_size, output_size
    hi = jax.lax.Precision.HIGHEST

    # o2o(cat(i2h(x), i2o(x)))  ==  x @ W_out + b_out   (eval mode)
    w_io = jnp.concatenate([w_i2h, w_i2o], axis=1)               # (C+I+H, H+O)
    b_io = jnp.concatenate([b_i2h, b_i2o], axis=1)               # (1, H+O)
    w_out = jnp.dot(w_io, w_o2o, precision=hi)                   # (C+I+H, O)
    b_out = jnp.dot(b_io, w_o2o, precision=hi) + b_o2o           # (1, O)

    n_rows = C + I + LANE
    W = jnp.zeros((n_rows, 2 * LANE), jnp.float32)
    W = W.at[:C + I + H, :H].set(w_i2h)
    W = W.at[:C + I + H, LANE:LANE + O].set(w_out)

    b = jnp.zeros((1, 2 * LANE), jnp.float32)
    b = b.at[:, :H].set(b_i2h)
    b = b.at[:, LANE:LANE + O].set(b_out)
    b = b.at[:, LANE + O:].set(NEG)
    return W, b


def rnn_forward_sequence(category, inputs, hidden0, W, b,
                         hidden_size, output_size):
    """Run the RNN cell over a whole sequence inside ONE pallas_call.

    category: (B, C)   inputs: (T, B, I)   hidden0: (B, H)
    Returns (log_probs (T, B, O), final_hidden (B, H)).
    """
    T, B, I = inputs.shape
    C = category.shape[1]
    H, O = hidden_size, output_size

    BB = SUB
    B_pad = max(BB, ((B + BB - 1) // BB) * BB)   # batch padded to sublanes
    nb = B_pad // BB
    Tt = min(TT_MAX, T)                          # timesteps per grid step
    T_pad = ((T + Tt - 1) // Tt) * Tt
    nt = T_pad // Tt

    cat_p = jnp.zeros((B_pad, C), jnp.float32).at[:B].set(category)
    inp_p = jnp.zeros((T_pad, B_pad, I), jnp.float32).at[:T, :B].set(inputs)
    h0_p = jnp.zeros((B_pad, LANE), jnp.float32).at[:B, :H].set(hidden0)

    kernel = make_rnn_kernel(C=C, I=I, B=BB, Tt=Tt, T_real=T, T_pad=T_pad)
    vmem = pltpu.MemorySpace.VMEM

    out_pad, hlast_pad = pl.pallas_call(
        kernel,
        out_shape=(
            jax.ShapeDtypeStruct((T_pad, B_pad, LANE), jnp.float32),
            jax.ShapeDtypeStruct((B_pad, LANE), jnp.float32),
        ),
        grid=(nb, nt),
        in_specs=[
            pl.BlockSpec((BB, C), lambda i, t: (i, 0), memory_space=vmem),
            pl.BlockSpec((Tt, BB, I), lambda i, t: (t, i, 0), memory_space=vmem),
            pl.BlockSpec((BB, LANE), lambda i, t: (i, 0), memory_space=vmem),
            pl.BlockSpec(W.shape, lambda i, t: (0, 0), memory_space=vmem),
            pl.BlockSpec(b.shape, lambda i, t: (0, 0), memory_space=vmem),
        ],
        out_specs=(
            pl.BlockSpec((Tt, BB, LANE), lambda i, t: (t, i, 0),
                         memory_space=vmem),
            pl.BlockSpec((BB, LANE), lambda i, t: (i, 0), memory_space=vmem),
        ),
        scratch_shapes=[
            pltpu.VMEM((BB, LANE), jnp.float32),       # carried hidden state
            pltpu.VMEM((BB, 2 * LANE), jnp.float32),   # category proj + bias
        ],
        compiler_params=pltpu.CompilerParams(
            dimension_semantics=("parallel", "arbitrary"),  # batch || , time serial
            vmem_limit_bytes=32 * 1024 * 1024,
        ),
    )(cat_p, inp_p, h0_p, W, b)

    return out_pad[:T, :B, :O], hlast_pad[:B, :H]


def rnn_forward(category, inp, hidden, W, b, hidden_size, output_size):
    """Single cell step, matching the PyTorch module's forward()."""
    out_seq, h_new = rnn_forward_sequence(
        category, inp[None], hidden, W, b, hidden_size, output_size)
    return out_seq[0], h_new


def _reference_step(category, inp, hidden,
                    w_i2h, b_i2h, w_i2o, b_i2o, w_o2o, b_o2o):
    hi = jax.lax.Precision.HIGHEST
    combined = jnp.concatenate([category, inp, hidden], axis=1)
    hidden_new = jnp.dot(combined, w_i2h, precision=hi) + b_i2h
    output = jnp.dot(combined, w_i2o, precision=hi) + b_i2o
    combined2 = jnp.concatenate([hidden_new, output], axis=1)
    out2 = jnp.dot(combined2, w_o2o, precision=hi) + b_o2o
    return jax.nn.log_softmax(out2, axis=1), hidden_new


if __name__ == "__main__":
    batch = 2
    n_categories = 8
    input_size = 16
    hidden_size = 32
    output_size = 16
    seq_len = 6

    key = jax.random.PRNGKey(0)
    ks = jax.random.split(key, 9)

    in1 = n_categories + input_size + hidden_size   # i2h / i2o input dim
    in2 = hidden_size + output_size                 # o2o input dim

    def init_w(k, fan_in, fan_out):
        bound = 1.0 / jnp.sqrt(jnp.float32(fan_in))
        return jax.random.uniform(k, (fan_in, fan_out), jnp.float32, -bound, bound)

    def init_b(k, fan_in, fan_out):
        bound = 1.0 / jnp.sqrt(jnp.float32(fan_in))
        return jax.random.uniform(k, (1, fan_out), jnp.float32, -bound, bound)

    w_i2h = init_w(ks[0], in1, hidden_size)
    b_i2h = init_b(ks[1], in1, hidden_size)
    w_i2o = init_w(ks[2], in1, output_size)
    b_i2o = init_b(ks[3], in1, output_size)
    w_o2o = init_w(ks[4], in2, output_size)
    b_o2o = init_b(ks[5], in2, output_size)

    category = jax.random.normal(ks[6], (batch, n_categories), jnp.float32)
    inputs = jax.random.normal(ks[7], (seq_len, batch, input_size), jnp.float32)
    hidden0 = jnp.zeros((batch, hidden_size), jnp.float32)   # initHidden()

    # Host-side, once: fold o2o + build the fused lane-dense weight / bias.
    W, b = fold_params(w_i2h, b_i2h, w_i2o, b_i2o, w_o2o, b_o2o,
                       n_categories, input_size, hidden_size, output_size)

    # --- single step (matches module.forward) -------------------------------
    out1, hid1 = rnn_forward(category, inputs[0], hidden0, W, b,
                             hidden_size, output_size)
    jax.block_until_ready((out1, hid1))

    ref_out1, ref_hid1 = _reference_step(category, inputs[0], hidden0,
                                         w_i2h, b_i2h, w_i2o, b_i2o,
                                         w_o2o, b_o2o)
    assert jnp.allclose(out1, ref_out1, atol=5e-4, rtol=5e-4), \
        "single-step log-softmax mismatch"
    assert jnp.allclose(hid1, ref_hid1, atol=5e-4, rtol=5e-4), \
        "single-step hidden mismatch"

    # --- full sequence inside ONE pallas_call --------------------------------
    out_seq, hid_last = rnn_forward_sequence(category, inputs, hidden0, W, b,
                                             hidden_size, output_size)
    jax.block_until_ready((out_seq, hid_last))

    ref_outs = []
    h = hidden0
    for t in range(seq_len):
        o, h = _reference_step(category, inputs[t], h,
                               w_i2h, b_i2h, w_i2o, b_i2o, w_o2o, b_o2o)
        ref_outs.append(o)
    ref_out_seq = jnp.stack(ref_outs, axis=0)

    assert jnp.allclose(out_seq, ref_out_seq, atol=5e-4, rtol=5e-4), \
        "sequence log-softmax mismatch"
    assert jnp.allclose(hid_last, h, atol=5e-4, rtol=5e-4), \
        "sequence final hidden mismatch"

    print("KERNEL_OK")
</pallas_src>

<mosaic_0001>
module attributes {stable_mosaic.version = 11 : i64} {
  func.func @kernel(%arg0: i32, %arg1: i32, %arg2: memref<8x8xf32, #tpu.memory_space<vmem>>, %arg3: memref<1x8x16xf32, #tpu.memory_space<vmem>>, %arg4: memref<8x128xf32, #tpu.memory_space<vmem>>, %arg5: memref<152x256xf32, #tpu.memory_space<vmem>>, %arg6: memref<1x256xf32, #tpu.memory_space<vmem>>, %arg7: memref<1x8x128xf32, #tpu.memory_space<vmem>>, %arg8: memref<8x128xf32, #tpu.memory_space<vmem>>, %arg9: memref<8x128xf32, #tpu.memory_space<vmem>>, %arg10: memref<8x256xf32, #tpu.memory_space<vmem>>) attributes {dimension_semantics = [#tpu.dimension_semantics<parallel>, #tpu.dimension_semantics<arbitrary>], iteration_bounds = array<i64: 1, 1>, scalar_prefetch = 0 : i64, scratch_operands = 2 : i64, tpu.core_type = #tpu.core_type<tc>, window_params = [{transform_indices = @transform_0, window_bounds = array<i64: 8, 8>}, {transform_indices = @transform_1, window_bounds = array<i64: 1, 8, 16>}, {transform_indices = @transform_2, window_bounds = array<i64: 8, 128>}, {pipeline_mode = #tpu.pipeline_mode<synchronous>, transform_indices = @transform_3, window_bounds = array<i64: 152, 256>}, {pipeline_mode = #tpu.pipeline_mode<synchronous>, transform_indices = @transform_4, window_bounds = array<i64: 1, 256>}, {transform_indices = @transform_5, window_bounds = array<i64: 1, 8, 128>}, {transform_indices = @transform_6, window_bounds = array<i64: 8, 128>}]} {
    %c0_i32 = arith.constant 0 : i32
    %0 = arith.cmpi eq, %arg1, %c0_i32 : i32
    %1 = arith.extui %0 : i1 to i32
    %c0_i32_0 = arith.constant 0 : i32
    %2 = arith.cmpi ne, %1, %c0_i32_0 : i32
    scf.if %2 {
      %c0_21 = arith.constant 0 : index
      %c0_22 = arith.constant 0 : index
      %38 = vector.load %arg4[%c0_21, %c0_22] : memref<8x128xf32, #tpu.memory_space<vmem>>, vector<8x128xf32>
      %c0_23 = arith.constant 0 : index
      %c0_24 = arith.constant 0 : index
      %39 = vector.load %arg9[%c0_23, %c0_24] : memref<8x128xf32, #tpu.memory_space<vmem>>, vector<8x128xf32>
      tpu.vector_store %arg9[%c0_23, %c0_24], %38 {strides = array<i32>} : memref<8x128xf32, #tpu.memory_space<vmem>>, vector<8x128xf32>,
      %c0_25 = arith.constant 0 : index
      %c0_26 = arith.constant 0 : index
      %40 = vector.load %arg2[%c0_25, %c0_26] : memref<8x8xf32, #tpu.memory_space<vmem>>, vector<8x8xf32>
      %c0_27 = arith.constant 0 : index
      %c0_28 = arith.constant 0 : index
      %41 = vector.load %arg5[%c0_27, %c0_28] : memref<152x256xf32, #tpu.memory_space<vmem>>, vector<8x256xf32>
      %cst_29 = arith.constant dense<0.000000e+00> : vector<8x256xf32>
      %42 = tpu.matmul %40, %41, %cst_29 {dimension_numbers = #tpu.dot_dimension_numbers<[1], [0], [0], [1], [0, 0, 1, 1], [], []>} : vector<8x8xf32>, vector<8x256xf32>, vector<8x256xf32> -> vector<8x256xf32>
      %c0_30 = arith.constant 0 : index
      %c0_31 = arith.constant 0 : index
      %43 = vector.load %arg6[%c0_30, %c0_31] : memref<1x256xf32, #tpu.memory_space<vmem>>, vector<1x256xf32>
      %44 = vector.broadcast %43 : vector<1x256xf32> to vector<8x256xf32>
      %45 = arith.addf %42, %44 : vector<8x256xf32>
      %c0_32 = arith.constant 0 : index
      %c0_33 = arith.constant 0 : index
      %46 = vector.load %arg10[%c0_32, %c0_33] : memref<8x256xf32, #tpu.memory_space<vmem>>, vector<8x256xf32>
      tpu.vector_store %arg10[%c0_32, %c0_33], %45 {strides = array<i32>} : memref<8x256xf32, #tpu.memory_space<vmem>>, vector<8x256xf32>,
    } else {
    }
    %c0 = arith.constant 0 : index
    %c0_1 = arith.constant 0 : index
    %c0_2 = arith.constant 0 : index
    %3 = vector.load %arg3[%c0, %c0_1, %c0_2] : memref<1x8x16xf32, #tpu.memory_space<vmem>>, vector<1x8x16xf32>
    %4 = vector.shape_cast %3 : vector<1x8x16xf32> to vector<8x16xf32>
    %c8 = arith.constant 8 : index
    %c0_3 = arith.constant 0 : index
    %5 = vector.load %arg5[%c8, %c0_3] : memref<152x256xf32, #tpu.memory_space<vmem>>, vector<16x256xf32>
    %cst = arith.constant dense<0.000000e+00> : vector<8x256xf32>
    %6 = tpu.matmul %4, %5, %cst {dimension_numbers = #tpu.dot_dimension_numbers<[1], [0], [0], [1], [0, 0, 1, 1], [], []>} : vector<8x16xf32>, vector<16x256xf32>, vector<8x256xf32> -> vector<8x256xf32>
    %7 = vector.shape_cast %6 : vector<8x256xf32> to vector<1x8x256xf32>
    %c0_4 = arith.constant 0 : index
    %c0_5 = arith.constant 0 : index
    %8 = vector.load %arg10[%c0_4, %c0_5] : memref<8x256xf32, #tpu.memory_space<vmem>>, vector<8x256xf32>
    %9 = vector.shape_cast %8 : vector<8x256xf32> to vector<1x8x256xf32>
    %10 = arith.addf %7, %9 : vector<1x8x256xf32>
    %11 = vector.extract_strided_slice %10 {offsets = [0, 0, 0], sizes = [1, 8, 128], strides = [1, 1, 1]} : vector<1x8x256xf32> to vector<1x8x128xf32>
    %12 = vector.extract_strided_slice %10 {offsets = [0, 0, 128], sizes = [1, 8, 128], strides = [1, 1, 1]} : vector<1x8x256xf32> to vector<1x8x128xf32>
    %c24 = arith.constant 24 : index
    %c0_6 = arith.constant 0 : index
    %13 = vector.load %arg5[%c24, %c0_6] : memref<152x256xf32, #tpu.memory_space<vmem>>, vector<128x128xf32>
    %c0_7 = arith.constant 0 : index
    %c0_8 = arith.constant 0 : index
    %14 = vector.load %arg9[%c0_7, %c0_8] : memref<8x128xf32, #tpu.memory_space<vmem>>, vector<8x128xf32>
    %15 = vector.shape_cast %11 : vector<1x8x128xf32> to vector<8x128xf32>
    %cst_9 = arith.constant dense<0.000000e+00> : vector<8x128xf32>
    %16 = tpu.matmul %14, %13, %cst_9 {dimension_numbers = #tpu.dot_dimension_numbers<[1], [0], [0], [1], [0, 0, 1, 1], [], []>} : vector<8x128xf32>, vector<128x128xf32>, vector<8x128xf32> -> vector<8x128xf32>
    %17 = arith.addf %15, %16 : vector<8x128xf32>
    %c0_10 = arith.constant 0 : index
    %c0_11 = arith.constant 0 : index
    %18 = vector.load %arg9[%c0_10, %c0_11] : memref<8x128xf32, #tpu.memory_space<vmem>>, vector<8x128xf32>
    tpu.vector_store %arg9[%c0_10, %c0_11], %17 {strides = array<i32>} : memref<8x128xf32, #tpu.memory_space<vmem>>, vector<8x128xf32>,
    %19 = vector.shape_cast %12 : vector<1x8x128xf32> to vector<8x128xf32>
    %c24_12 = arith.constant 24 : index
    %c128 = arith.constant 128 : index
    %20 = vector.load %arg5[%c24_12, %c128] : memref<152x256xf32, #tpu.memory_space<vmem>>, vector<128x128xf32>
    %cst_13 = arith.constant dense<0.000000e+00> : vector<8x128xf32>
    %21 = tpu.matmul %14, %20, %cst_13 {dimension_numbers = #tpu.dot_dimension_numbers<[1], [0], [0], [1], [0, 0, 1, 1], [], []>} : vector<8x128xf32>, vector<128x128xf32>, vector<8x128xf32> -> vector<8x128xf32>
    %22 = arith.addf %19, %21 : vector<8x128xf32>
    %cst_14 = arith.constant dense<0xFF800000> : vector<8xf32>
    %23 = vector.multi_reduction <maximumf>, %22, %cst_14 [1] : vector<8x128xf32> to vector<8xf32>
    %24 = vector.shape_cast %23 : vector<8xf32> to vector<8x1xf32>
    %25 = vector.broadcast %24 : vector<8x1xf32> to vector<8x128xf32>
    %26 = arith.subf %22, %25 : vector<8x128xf32>
    %27 = math.exp %26 : vector<8x128xf32>
    %cst_15 = arith.constant dense<0.000000e+00> : vector<8xf32>
    %28 = vector.multi_reduction <add>, %27, %cst_15 [1] : vector<8x128xf32> to vector<8xf32>
    %29 = vector.shape_cast %28 : vector<8xf32> to vector<8x1xf32>
    %30 = math.log %29 : vector<8x1xf32>
    %31 = vector.broadcast %30 : vector<8x1xf32> to vector<8x128xf32>
    %32 = arith.subf %26, %31 : vector<8x128xf32>
    %33 = vector.shape_cast %32 : vector<8x128xf32> to vector<1x8x128xf32>
    %c0_16 = arith.constant 0 : index
    %c0_17 = arith.constant 0 : index
    %c0_18 = arith.constant 0 : index
    %34 = vector.load %arg7[%c0_16, %c0_17, %c0_18] : memref<1x8x128xf32, #tpu.memory_space<vmem>>, vector<1x8x128xf32>
    tpu.vector_store %arg7[%c0_16, %c0_17, %c0_18], %33 {strides = array<i32>} : memref<1x8x128xf32, #tpu.memory_space<vmem>>, vector<1x8x128xf32>,
    %c0_i32_19 = arith.constant 0 : i32
    %35 = arith.cmpi eq, %arg1, %c0_i32_19 : i32
    %36 = arith.extui %35 : i1 to i32
    %c0_i32_20 = arith.constant 0 : i32
    %37 = arith.cmpi ne, %36, %c0_i32_20 : i32
    scf.if %37 {
      %c0_21 = arith.constant 0 : index
      %c0_22 = arith.constant 0 : index
      %38 = vector.load %arg9[%c0_21, %c0_22] : memref<8x128xf32, #tpu.memory_space<vmem>>, vector<8x128xf32>
      %c0_23 = arith.constant 0 : index
      %c0_24 = arith.constant 0 : index
      %39 = vector.load %arg8[%c0_23, %c0_24] : memref<8x128xf32, #tpu.memory_space<vmem>>, vector<8x128xf32>
      tpu.vector_store %arg8[%c0_23, %c0_24], %38 {strides = array<i32>} : memref<8x128xf32, #tpu.memory_space<vmem>>, vector<8x128xf32>,
    } else {
    }
    return
  }
  func.func @transform_0(%arg0: i32, %arg1: i32) -> (i32, i32) {
    %c0_i32 = arith.constant 0 : i32
    %c0_i32_0 = arith.constant 0 : i32
    return %arg0, %c0_i32 : i32, i32
  }
  func.func @transform_1(%arg0: i32, %arg1: i32) -> (i32, i32, i32) {
    %c0_i32 = arith.constant 0 : i32
    %c0_i32_0 = arith.constant 0 : i32
    return %arg1, %arg0, %c0_i32 : i32, i32, i32
  }
  func.func @transform_2(%arg0: i32, %arg1: i32) -> (i32, i32) {
    %c0_i32 = arith.constant 0 : i32
    %c0_i32_0 = arith.constant 0 : i32
    return %arg0, %c0_i32 : i32, i32
  }
  func.func @transform_3(%arg0: i32, %arg1: i32) -> (i32, i32) {
    %c0_i32 = arith.constant 0 : i32
    %c0_i32_0 = arith.constant 0 : i32
    %c0_i32_1 = arith.constant 0 : i32
    return %c0_i32, %c0_i32_0 : i32, i32
  }
  func.func @transform_4(%arg0: i32, %arg1: i32) -> (i32, i32) {
    %c0_i32 = arith.constant 0 : i32
    %c0_i32_0 = arith.constant 0 : i32
    %c0_i32_1 = arith.constant 0 : i32
    return %c0_i32, %c0_i32_0 : i32, i32
  }
  func.func @transform_5(%arg0: i32, %arg1: i32) -> (i32, i32, i32) {
    %c0_i32 = arith.constant 0 : i32
    %c0_i32_0 = arith.constant 0 : i32
    return %arg1, %arg0, %c0_i32 : i32, i32, i32
  }
  func.func @transform_6(%arg0: i32, %arg1: i32) -> (i32, i32) {
    %c0_i32 = arith.constant 0 : i32
    %c0_i32_0 = arith.constant 0 : i32
    return %arg0, %c0_i32 : i32, i32
  }
}

</mosaic_0001>

<llo_original>
// kernel: tpu_custom_call.1
$region0: #{tpu_custom_call.1}
  #allocation0 [shape = 'u32[]', space=smem, size = 0x4, offset = 0x4, fixed_abs, tag = 'smem constant byte address 0x4 - core index']
  #allocation1 [shape = 'u32[144,128]{1,0:T(1,128)}', space=vmem, size = 0x12000, scoped, tag = 'internal scratch']
  #allocation2 [shape = 'f32[8,128]{1,0:T(8,128)}', space=vmem, size = 0x1000, scoped, tag = 'scratch operand']
  #allocation3 [shape = 'f32[8,256]{1,0:T(8,128)}', space=vmem, size = 0x2000, scoped, tag = 'scratch operand']
  %s0 = inlined_call_operand.hbm [shape: f32[8,8], index: 0, kind: input, shape index: {}]
  %s1 = inlined_call_operand.hbm [shape: f32[1,8,16], index: 1, kind: input, shape index: {}]
  %s2 = inlined_call_operand.hbm [shape: f32[8,128], index: 2, kind: input, shape index: {}]
  %s3 = inlined_call_operand.hbm [shape: f32[152,256], index: 3, kind: input, shape index: {}]
  %s4 = inlined_call_operand.vmem [shape: f32[1,256], index: 4, kind: input, shape index: {}]
  %s5 = inlined_call_operand.hbm [shape: f32[1,8,128], index: 5, kind: output, shape index: {0}]
  %s6 = inlined_call_operand.hbm [shape: f32[8,128], index: 6, kind: output, shape index: {1}]
  %7 = xla_tuple %s5, %s6
  %s8 = sld [smem:[#allocation0]]
  $region62: #{tpu_custom_call.1} parent=0
    _
  %s10 = ssub.s32 1, %s8
  %s11 = scalar_select 0, %s10, %s8
  $region1: #{tpu_custom_call.1} parent=0
    #allocation4 [shape = 'u8[4096]{0}', space=vmem, size = 0x1000, scoped, tag = 'input window, operand 0, single buffered']
    #allocation5 [shape = 's32[1]{0}', space=sflag, size = 0x4, scoped, tag = 'scoped memory for tpu_custom_call.1']
    #allocation6 [shape = 's32[1]{0}', space=sflag, size = 0x4, scoped, tag = 'scoped memory for tpu_custom_call.1']
    #allocation7 [shape = 'u8[4096]{0}', space=vmem, size = 0x1000, scoped, tag = 'input window, operand 1, single buffered']
    #allocation8 [shape = 's32[1]{0}', space=sflag, size = 0x4, scoped, tag = 'scoped memory for tpu_custom_call.1']
    #allocation9 [shape = 'u8[4096]{0}', space=vmem, size = 0x1000, scoped, tag = 'input window, operand 2, single buffered']
    #allocation10 [shape = 'u8[155648]{0}', space=vmem, size = 0x26000, scoped, tag = 'input window, operand 3, single buffered']
    #allocation11 [shape = 's32[1]{0}', space=sflag, size = 0x4, scoped, tag = 'scoped memory for tpu_custom_call.1']
    #allocation12 [shape = 'u8[4096]{0}', space=vmem, size = 0x1000, scoped, tag = 'output window, operand 0, single buffered']
    #allocation13 [shape = 'u8[4096]{0}', space=vmem, size = 0x1000, scoped, tag = 'output window, operand 1, single buffered']
    #allocation14 [shape = 's32[1]{0}', space=sflag, size = 0x4, scoped, tag = 'scoped memory for tpu_custom_call.1']
    %12 = vsyncpa [#allocation5], 0
    %13 = vsyncpa [#allocation8], 0
    %14 = vsyncpa [#allocation11], 0
    %15 = vsyncpa [#allocation6], 0
    %16 = vsyncpa [#allocation14], 0
    // Predicated region
    $region2: #{tpu_custom_call.1} parent=1 // pred_check
      _
    $region3: #{tpu_custom_call.1} parent=1 // pred_check_branch
      %18 = sbr.rel (0) target = $region5
    $region4: #{tpu_custom_call.1} parent=1 // pred_region
      %s20 = ssub.s32 128, 128
      %21 = vsyncadd [#allocation5], %s20
      %s23 = sshll.u32 [#allocation4], 4
      %s24 = int_to_ptr.vmem [resolvable:$true] %s23
      %26 = dma.hbm_to_vmem [thread:$0]  %s0, 128, %s24, [#allocation5]
    $region5: #{tpu_custom_call.1} parent=1 // pred_fallthru
      _
    // Predicated region
    $region6: #{tpu_custom_call.1} parent=1 // pred_check
      _
    $region7: #{tpu_custom_call.1} parent=1 // pred_check_branch
      %28 = sbr.rel (0) target = $region9
    $region8: #{tpu_custom_call.1} parent=1 // pred_region
      %s30 = ssub.s32 128, 128
      %31 = vsyncadd [#allocation8], %s30
      %s33 = sshll.u32 [#allocation7], 4
      %s34 = int_to_ptr.vmem [resolvable:$true] %s33
      %36 = dma.hbm_to_vmem [thread:$0]  %s1, 128, %s34, [#allocation8]
    $region9: #{tpu_custom_call.1} parent=1 // pred_fallthru
      _
    // Predicated region
    $region10: #{tpu_custom_call.1} parent=1 // pred_check
      _
    $region11: #{tpu_custom_call.1} parent=1 // pred_check_branch
      %38 = sbr.rel (0) target = $region13
    $region12: #{tpu_custom_call.1} parent=1 // pred_region
      %s40 = ssub.s32 128, 128
      %41 = vsyncadd [#allocation8], %s40
      %s43 = sshll.u32 [#allocation9], 4
      %s44 = int_to_ptr.vmem [resolvable:$true] %s43
      %46 = dma.hbm_to_vmem [thread:$0]  %s2, 128, %s44, [#allocation8]
    $region13: #{tpu_custom_call.1} parent=1 // pred_fallthru
      _
    // Predicated region
    $region14: #{tpu_custom_call.1} parent=1 // pred_check
      _
    $region15: #{tpu_custom_call.1} parent=1 // pred_check_branch
      %48 = sbr.rel (0) target = $region17
    $region16: #{tpu_custom_call.1} parent=1 // pred_region
      %s50 = ssub.s32 4864, 4864
      %51 = vsyncadd [#allocation11], %s50
      %s52 = sshll.u32 [#allocation10], 4
      %s53 = int_to_ptr.vmem [resolvable:$true] %s52
      %58 = dma.hbm_to_vmem [thread:$0]  %s3, 4864, %s53, [#allocation11], 256, 256, 16
    $region17: #{tpu_custom_call.1} parent=1 // pred_fallthru
      _
    // Predicated region
    $region18: #{tpu_custom_call.1} parent=1 // pred_check
      _
    $region19: #{tpu_custom_call.1} parent=1 // pred_check_branch
      %60 = sbr.rel (0) target = $region21
    $region20: #{tpu_custom_call.1} parent=1 // pred_region
      _
    $region21: #{tpu_custom_call.1} parent=1 // pred_fallthru
      _
    // Predicated region
    $region22: #{tpu_custom_call.1} parent=1 // pred_check
      _
    $region23: #{tpu_custom_call.1} parent=1 // pred_check_branch
      %62 = sbr.rel (0) target = $region25
    $region24: #{tpu_custom_call.1} parent=1 // pred_region
      %63 = dma.done [#allocation5], 128
    $region25: #{tpu_custom_call.1} parent=1 // pred_fallthru
      _
    // Predicated region
    $region26: #{tpu_custom_call.1} parent=1 // pred_check
      _
    $region27: #{tpu_custom_call.1} parent=1 // pred_check_branch
      %65 = sbr.rel (0) target = $region29
    $region28: #{tpu_custom_call.1} parent=1 // pred_region
      %66 = dma.done [#allocation8], 128
    $region29: #{tpu_custom_call.1} parent=1 // pred_fallthru
      _
    // Predicated region
    $region30: #{tpu_custom_call.1} parent=1 // pred_check
      _
    $region31: #{tpu_custom_call.1} parent=1 // pred_check_branch
      %68 = sbr.rel (0) target = $region33
    $region32: #{tpu_custom_call.1} parent=1 // pred_region
      %69 = dma.done [#allocation8], 128
    $region33: #{tpu_custom_call.1} parent=1 // pred_fallthru
      _
    // Predicated region
    $region34: #{tpu_custom_call.1} parent=1 // pred_check
      _
    $region35: #{tpu_custom_call.1} parent=1 // pred_check_branch
      %71 = sbr.rel (0) target = $region37
    $region36: #{tpu_custom_call.1} parent=1 // pred_region
      %72 = dma.done [#allocation11], 4864
    $region37: #{tpu_custom_call.1} parent=1 // pred_fallthru
      _
    %p73 = scmp.eq.s32.totalorder 0, 0
    // Predicated region
    $region38: #{tpu_custom_call.1} parent=1 // pred_check
      %p74 = pneg %p73
    $region39: #{tpu_custom_call.1} parent=1 // pred_check_branch
      %76 = sbr.rel (%p74) target = $region41
    $region40: #{tpu_custom_call.1} parent=1 // pred_region
      %v77 = vld [vmem:[#allocation9] sm:$0xff]
      %78 = vst [vmem:[#allocation2] sm:$0xff] %v77
      %v79 = vld [vmem:[#allocation4] sm:$0xff]
      %v80 = vld [vmem:[#allocation10] sm:$0xff]
      %v81 = vld [vmem:[#allocation10 + $0x8] sm:$0xff]
      %v82 = vld [vmem:[%s4] sm:$0x3]
      %v84 = vlaneseq
      %v85 = vshrl.u32 %v84, 7
      %v86 = vsub.s32 0, %v85
      %v87 = vrot.slane %v82, %v86
      %v88 = vlaneseq
      %v89 = vshrl.u32 %v88, 7
      %v90 = vsub.s32 1, %v89
      %v91 = vrot.slane %v82, %v90
      %vm94 = vcmask 64512
      %v96 = vsel %vm94, %v79, 0
      %98 = vmatprep.subr.mxu0 0.0
      %99 = vmatpush1.msra.mxu0 0.0
      %100 = vmatprep.subr.mxu0 0.0
      %101 = vmatpush1.msra.mxu0 0.0
      %102 = vmatprep.subr.mxu0 0.0
      %103 = vmatpush1.msra.mxu0 0.0
      %104 = vmatprep.subr.mxu0 0.0
      %105 = vmatpush1.msra.mxu0 0.0
      %106 = vmatprep.subr.mxu0 0.0
      %107 = vmatpush1.msra.mxu0 0.0
      %108 = vmatprep.subr.mxu0 0.0
      %109 = vmatpush1.msra.mxu0 0.0
      %110 = vmatprep.subr.mxu0 0.0
      %111 = vmatpush1.msra.mxu0 0.0
      %112 = vmatprep.subr.mxu0 0.0
      %113 = vmatpush1.msra.mxu0 0.0
      %114 = vmatprep.subr.mxu0 0.0
      %115 = vmatpush1.msra.mxu0 0.0
      %116 = vmatprep.subr.mxu0 0.0
      %117 = vmatpush1.msra.mxu0 0.0
      %118 = vmatprep.subr.mxu0 0.0
      %119 = vmatpush1.msra.mxu0 0.0
      %120 = vmatprep.subr.mxu0 0.0
      %121 = vmatpush1.msra.mxu0 0.0
      %122 = vmatprep.subr.mxu0 0.0
      %123 = vmatpush1.msra.mxu0 0.0
      %124 = vmatprep.subr.mxu0 0.0
      %125 = vmatpush1.msra.mxu0 0.0
      %126 = vmatprep.subr.mxu0 0.0
      %127 = vmatpush1.msra.mxu0 0.0
      %128 = vmatprep.subr.mxu0 %v81
      %129 = vmatpush1.msra.mxu0 %v80
      %130 = vmatprep.subr.mxu0 0.0
      %131 = vmatpush2.msra.mxu0 0.0
      %132 = vmatprep.subr.mxu0 0.0
      %133 = vmatpush2.msra.mxu0 0.0
      %134 = vmatprep.subr.mxu0 0.0
      %135 = vmatpush2.msra.mxu0 0.0
      %136 = vmatprep.subr.mxu0 0.0
      %137 = vmatpush2.msra.mxu0 0.0
      %138 = vmatprep.subr.mxu0 0.0
      %139 = vmatpush2.msra.mxu0 0.0
      %140 = vmatprep.subr.mxu0 0.0
      %141 = vmatpush2.msra.mxu0 0.0
      %142 = vmatprep.subr.mxu0 0.0
      %143 = vmatpush2.msra.mxu0 0.0
      %144 = vmatprep.subr.mxu0 0.0
      %145 = vmatpush2.msra.mxu0 0.0
      %146 = vmatprep.subr.mxu0 0.0
      %147 = vmatpush2.msra.mxu0 0.0
      %148 = vmatprep.subr.mxu0 0.0
      %149 = vmatpush2.msra.mxu0 0.0
      %150 = vmatprep.subr.mxu0 0.0
      %151 = vmatpush2.msra.mxu0 0.0
      %152 = vmatprep.subr.mxu0 0.0
      %153 = vmatpush2.msra.mxu0 0.0
      %154 = vmatprep.subr.mxu0 0.0
      %155 = vmatpush2.msra.mxu0 0.0
      %156 = vmatprep.subr.mxu0 0.0
      %157 = vmatpush2.msra.mxu0 0.0
      %158 = vmatprep.subr.mxu0 0.0
      %159 = vmatpush2.msra.mxu0 0.0
      %160 = vmatprep.subr.mxu0 0.0
      %161 = vmatpush2.msra.mxu0 0.0
      %162 = vmatprep.mubr.f32.mxu0 0.0
      %163 = vmatmul.mubr.f32.gmra.mxu0 %v96
      %v164 = vpop.f32.mrf.mxu0
      %v165 = vadd.f32 %v87, %v164
      %v166 = vpop.f32.mrf.mxu0
      %v167 = vadd.f32 %v91, %v166
      %168 = vdwg.mxu0
      %169 = vst [vmem:[#allocation3] sm:$0xff] %v165
      %170 = vst [vmem:[#allocation3 + $0x8] sm:$0xff] %v167
    $region41: #{tpu_custom_call.1} parent=1 // pred_fallthru
      _
    %v171 = vld [vmem:[#allocation7] sm:$0xff]
    %v172 = vld [vmem:[#allocation10 + $0x10] sm:$0xff]
    %v173 = vld [vmem:[#allocation10 + $0x18] sm:$0xff]
    %v174 = vld [vmem:[#allocation10 + $0x20] sm:$0xff]
    %v175 = vld [vmem:[#allocation10 + $0x28] sm:$0xff]
    %vm176 = vcmask 130048
    %v178 = vsel %vm176, %v171, 0
    %180 = vmatprep.subr.mxu0 0.0
    %181 = vmatpush1.msra.mxu0 0.0
    %182 = vmatprep.subr.mxu0 0.0
    %183 = vmatpush1.msra.mxu0 0.0
    %184 = vmatprep.subr.mxu0 0.0
    %185 = vmatpush1.msra.mxu0 0.0
    %186 = vmatprep.subr.mxu0 0.0
    %187 = vmatpush1.msra.mxu0 0.0
    %188 = vmatprep.subr.mxu0 0.0
    %189 = vmatpush1.msra.mxu0 0.0
    %190 = vmatprep.subr.mxu0 0.0
    %191 = vmatpush1.msra.mxu0 0.0
    %192 = vmatprep.subr.mxu0 0.0
    %193 = vmatpush1.msra.mxu0 0.0
    %194 = vmatprep.subr.mxu0 0.0
    %195 = vmatpush1.msra.mxu0 0.0
    %196 = vmatprep.subr.mxu0 0.0
    %197 = vmatpush1.msra.mxu0 0.0
    %198 = vmatprep.subr.mxu0 0.0
    %199 = vmatpush1.msra.mxu0 0.0
    %200 = vmatprep.subr.mxu0 0.0
    %201 = vmatpush1.msra.mxu0 0.0
    %202 = vmatprep.subr.mxu0 0.0
    %203 = vmatpush1.msra.mxu0 0.0
    %204 = vmatprep.subr.mxu0 0.0
    %205 = vmatpush1.msra.mxu0 0.0
    %206 = vmatprep.subr.mxu0 0.0
    %207 = vmatpush1.msra.mxu0 0.0
    %208 = vmatprep.subr.mxu0 %v175
    %209 = vmatpush1.msra.mxu0 %v174
    %210 = vmatprep.subr.mxu0 %v173
    %211 = vmatpush1.msra.mxu0 %v172
    %212 = vmatprep.subr.mxu0 0.0
    %213 = vmatpush2.msra.mxu0 0.0
    %214 = vmatprep.subr.mxu0 0.0
    %215 = vmatpush2.msra.mxu0 0.0
    %216 = vmatprep.subr.mxu0 0.0
    %217 = vmatpush2.msra.mxu0 0.0
    %218 = vmatprep.subr.mxu0 0.0
    %219 = vmatpush2.msra.mxu0 0.0
    %220 = vmatprep.subr.mxu0 0.0
    %221 = vmatpush2.msra.mxu0 0.0
    %222 = vmatprep.subr.mxu0 0.0
    %223 = vmatpush2.msra.mxu0 0.0
    %224 = vmatprep.subr.mxu0 0.0
    %225 = vmatpush2.msra.mxu0 0.0
    %226 = vmatprep.subr.mxu0 0.0
    %227 = vmatpush2.msra.mxu0 0.0
    %228 = vmatprep.subr.mxu0 0.0
    %229 = vmatpush2.msra.mxu0 0.0
    %230 = vmatprep.subr.mxu0 0.0
    %231 = vmatpush2.msra.mxu0 0.0
    %232 = vmatprep.subr.mxu0 0.0
    %233 = vmatpush2.msra.mxu0 0.0
    %234 = vmatprep.subr.mxu0 0.0
    %235 = vmatpush2.msra.mxu0 0.0
    %236 = vmatprep.subr.mxu0 0.0
    %237 = vmatpush2.msra.mxu0 0.0
    %238 = vmatprep.subr.mxu0 0.0
    %239 = vmatpush2.msra.mxu0 0.0
    %240 = vmatprep.subr.mxu0 0.0
    %241 = vmatpush2.msra.mxu0 0.0
    %242 = vmatprep.subr.mxu0 0.0
    %243 = vmatpush2.msra.mxu0 0.0
    %244 = vmatprep.mubr.f32.mxu0 0.0
    %245 = vmatmul.mubr.f32.gmra.mxu0 %v178
    %v246 = vpop.f32.mrf.mxu0
    %v247 = vadd.f32 0.0, %v246
    %v248 = vpop.f32.mrf.mxu0
    %v249 = vadd.f32 0.0, %v248
    %250 = vdwg.mxu0
    %v251 = vld [vmem:[#allocation3] sm:$0xff]
    %v252 = vld [vmem:[#allocation3 + $0x8] sm:$0xff]
    %v253 = vadd.f32 %v247, %v251
    %v254 = vadd.f32 %v249, %v252
    %v255 = vld [vmem:[#allocation10 + $0x30] sm:$0xff]
    %v256 = vld [vmem:[#allocation10 + $0x40] sm:$0xff]
    %v257 = vld [vmem:[#allocation10 + $0x50] sm:$0xff]
    %v258 = vld [vmem:[#allocation10 + $0x60] sm:$0xff]
    %v259 = vld [vmem:[#allocation10 + $0x70] sm:$0xff]
    %v260 = vld [vmem:[#allocation10 + $0x80] sm:$0xff]
    %v261 = vld [vmem:[#allocation10 + $0x90] sm:$0xff]
    %v262 = vld [vmem:[#allocation10 + $0xa0] sm:$0xff]
    %v263 = vld [vmem:[#allocation10 + $0xb0] sm:$0xff]
    %v264 = vld [vmem:[#allocation10 + $0xc0] sm:$0xff]
    %v265 = vld [vmem:[#allocation10 + $0xd0] sm:$0xff]
    %v266 = vld [vmem:[#allocation10 + $0xe0] sm:$0xff]
    %v267 = vld [vmem:[#allocation10 + $0xf0] sm:$0xff]
    %v268 = vld [vmem:[#allocation10 + $0x100] sm:$0xff]
    %v269 = vld [vmem:[#allocation10 + $0x110] sm:$0xff]
    %v270 = vld [vmem:[#allocation10 + $0x120] sm:$0xff]
    %v271 = vld [vmem:[#allocation2] sm:$0xff]
    %272 = vmatprep.subr.mxu0 0.0
    %273 = vmatpush1.msra.mxu0 %v270
    %274 = vmatprep.subr.mxu0 0.0
    %275 = vmatpush1.msra.mxu0 %v269
    %276 = vmatprep.subr.mxu0 0.0
    %277 = vmatpush1.msra.mxu0 %v268
    %278 = vmatprep.subr.mxu0 0.0
    %279 = vmatpush1.msra.mxu0 %v267
    %280 = vmatprep.subr.mxu0 0.0
    %281 = vmatpush1.msra.mxu0 %v266
    %282 = vmatprep.subr.mxu0 0.0
    %283 = vmatpush1.msra.mxu0 %v265
    %284 = vmatprep.subr.mxu0 0.0
    %285 = vmatpush1.msra.mxu0 %v264
    %286 = vmatprep.subr.mxu0 0.0
    %287 = vmatpush1.msra.mxu0 %v263
    %288 = vmatprep.subr.mxu0 0.0
    %289 = vmatpush1.msra.mxu0 %v262
    %290 = vmatprep.subr.mxu0 0.0
    %291 = vmatpush1.msra.mxu0 %v261
    %292 = vmatprep.subr.mxu0 0.0
    %293 = vmatpush1.msra.mxu0 %v260
    %294 = vmatprep.subr.mxu0 0.0
    %295 = vmatpush1.msra.mxu0 %v259
    %296 = vmatprep.subr.mxu0 0.0
    %297 = vmatpush1.msra.mxu0 %v258
    %298 = vmatprep.subr.mxu0 0.0
    %299 = vmatpush1.msra.mxu0 %v257
    %300 = vmatprep.subr.mxu0 0.0
    %301 = vmatpush1.msra.mxu0 %v256
    %302 = vmatprep.subr.mxu0 0.0
    %303 = vmatpush1.msra.mxu0 %v255
    %304 = vmatprep.subr.mxu0 0.0
    %305 = vmatpush2.msra.mxu0 0.0
    %306 = vmatprep.subr.mxu0 0.0
    %307 = vmatpush2.msra.mxu0 0.0
    %308 = vmatprep.subr.mxu0 0.0
    %309 = vmatpush2.msra.mxu0 0.0
    %310 = vmatprep.subr.mxu0 0.0
    %311 = vmatpush2.msra.mxu0 0.0
    %312 = vmatprep.subr.mxu0 0.0
    %313 = vmatpush2.msra.mxu0 0.0
    %314 = vmatprep.subr.mxu0 0.0
    %315 = vmatpush2.msra.mxu0 0.0
    %316 = vmatprep.subr.mxu0 0.0
    %317 = vmatpush2.msra.mxu0 0.0
    %318 = vmatprep.subr.mxu0 0.0
    %319 = vmatpush2.msra.mxu0 0.0
    %320 = vmatprep.subr.mxu0 0.0
    %321 = vmatpush2.msra.mxu0 0.0
    %322 = vmatprep.subr.mxu0 0.0
    %323 = vmatpush2.msra.mxu0 0.0
    %324 = vmatprep.subr.mxu0 0.0
    %325 = vmatpush2.msra.mxu0 0.0
    %326 = vmatprep.subr.mxu0 0.0
    %327 = vmatpush2.msra.mxu0 0.0
    %328 = vmatprep.subr.mxu0 0.0
    %329 = vmatpush2.msra.mxu0 0.0
    %330 = vmatprep.subr.mxu0 0.0
    %331 = vmatpush2.msra.mxu0 0.0
    %332 = vmatprep.subr.mxu0 0.0
    %333 = vmatpush2.msra.mxu0 0.0
    %334 = vmatprep.subr.mxu0 0.0
    %335 = vmatpush2.msra.mxu0 0.0
    %336 = vmatprep.mubr.f32.mxu0 0.0
    %337 = vmatmul.mubr.f32.gmra.mxu0 %v271
    %v338 = vpop.f32.mrf.mxu0
    %v339 = vadd.f32 0.0, %v338
    %v340 = vpop.f32.mrf.mxu0
    %341 = vdwg.mxu0
    %v342 = vadd.f32 %v253, %v339
    %343 = vst [vmem:[#allocation2] sm:$0xff] %v342
    %v344 = vld [vmem:[#allocation10 + $0x38] sm:$0xff]
    %v345 = vld [vmem:[#allocation10 + $0x48] sm:$0xff]
    %v346 = vld [vmem:[#allocation10 + $0x58] sm:$0xff]
    %v347 = vld [vmem:[#allocation10 + $0x68] sm:$0xff]
    %v348 = vld [vmem:[#allocation10 + $0x78] sm:$0xff]
    %v349 = vld [vmem:[#allocation10 + $0x88] sm:$0xff]
    %v350 = vld [vmem:[#allocation10 + $0x98] sm:$0xff]
    %v351 = vld [vmem:[#allocation10 + $0xa8] sm:$0xff]
    %v352 = vld [vmem:[#allocation10 + $0xb8] sm:$0xff]
    %v353 = vld [vmem:[#allocation10 + $0xc8] sm:$0xff]
    %v354 = vld [vmem:[#allocation10 + $0xd8] sm:$0xff]
    %v355 = vld [vmem:[#allocation10 + $0xe8] sm:$0xff]
    %v356 = vld [vmem:[#allocation10 + $0xf8] sm:$0xff]
    %v357 = vld [vmem:[#allocation10 + $0x108] sm:$0xff]
    %v358 = vld [vmem:[#allocation10 + $0x118] sm:$0xff]
    %v359 = vld [vmem:[#allocation10 + $0x128] sm:$0xff]
    %360 = vmatprep.subr.mxu0 0.0
    %361 = vmatpush1.msra.mxu0 %v359
    %362 = vmatprep.subr.mxu0 0.0
    %363 = vmatpush1.msra.mxu0 %v358
    %364 = vmatprep.subr.mxu0 0.0
    %365 = vmatpush1.msra.mxu0 %v357
    %366 = vmatprep.subr.mxu0 0.0
    %367 = vmatpush1.msra.mxu0 %v356
    %368 = vmatprep.subr.mxu0 0.0
    %369 = vmatpush1.msra.mxu0 %v355
    %370 = vmatprep.subr.mxu0 0.0
    %371 = vmatpush1.msra.mxu0 %v354
    %372 = vmatprep.subr.mxu0 0.0
    %373 = vmatpush1.msra.mxu0 %v353
    %374 = vmatprep.subr.mxu0 0.0
    %375 = vmatpush1.msra.mxu0 %v352
    %376 = vmatprep.subr.mxu0 0.0
    %377 = vmatpush1.msra.mxu0 %v351
    %378 = vmatprep.subr.mxu0 0.0
    %379 = vmatpush1.msra.mxu0 %v350
    %380 = vmatprep.subr.mxu0 0.0
    %381 = vmatpush1.msra.mxu0 %v349
    %382 = vmatprep.subr.mxu0 0.0
    %383 = vmatpush1.msra.mxu0 %v348
    %384 = vmatprep.subr.mxu0 0.0
    %385 = vmatpush1.msra.mxu0 %v347
    %386 = vmatprep.subr.mxu0 0.0
    %387 = vmatpush1.msra.mxu0 %v346
    %388 = vmatprep.subr.mxu0 0.0
    %389 = vmatpush1.msra.mxu0 %v345
    %390 = vmatprep.subr.mxu0 0.0
    %391 = vmatpush1.msra.mxu0 %v344
    %392 = vmatprep.subr.mxu0 0.0
    %393 = vmatpush2.msra.mxu0 0.0
    %394 = vmatprep.subr.mxu0 0.0
    %395 = vmatpush2.msra.mxu0 0.0
    %396 = vmatprep.subr.mxu0 0.0
    %397 = vmatpush2.msra.mxu0 0.0
    %398 = vmatprep.subr.mxu0 0.0
    %399 = vmatpush2.msra.mxu0 0.0
    %400 = vmatprep.subr.mxu0 0.0
    %401 = vmatpush2.msra.mxu0 0.0
    %402 = vmatprep.subr.mxu0 0.0
    %403 = vmatpush2.msra.mxu0 0.0
    %404 = vmatprep.subr.mxu0 0.0
    %405 = vmatpush2.msra.mxu0 0.0
    %406 = vmatprep.subr.mxu0 0.0
    %407 = vmatpush2.msra.mxu0 0.0
    %408 = vmatprep.subr.mxu0 0.0
    %409 = vmatpush2.msra.mxu0 0.0
    %410 = vmatprep.subr.mxu0 0.0
    %411 = vmatpush2.msra.mxu0 0.0
    %412 = vmatprep.subr.mxu0 0.0
    %413 = vmatpush2.msra.mxu0 0.0
    %414 = vmatprep.subr.mxu0 0.0
    %415 = vmatpush2.msra.mxu0 0.0
    %416 = vmatprep.subr.mxu0 0.0
    %417 = vmatpush2.msra.mxu0 0.0
    %418 = vmatprep.subr.mxu0 0.0
    %419 = vmatpush2.msra.mxu0 0.0
    %420 = vmatprep.subr.mxu0 0.0
    %421 = vmatpush2.msra.mxu0 0.0
    %422 = vmatprep.subr.mxu0 0.0
    %423 = vmatpush2.msra.mxu0 0.0
    %424 = vmatprep.mubr.f32.mxu0 0.0
    %425 = vmatmul.mubr.f32.gmra.mxu0 %v271
    %v426 = vpop.f32.mrf.mxu0
    %v427 = vadd.f32 0.0, %v426
    %v428 = vpop.f32.mrf.mxu0
    %429 = vdwg.mxu0
    %v430 = vadd.f32 %v254, %v427
    %431 = vmax.xlane.f32.xlu0 %v430
    %v432 = vpop.xlane.xlu0 %431
    %v433 = vsub.f32 %v430, %v432
    %v434 = vmul.f32 %v433, 1.442695
    %v435 = vpow.pop %v434
    %436 = vadd.xlane.f32.xlu0 %v435
    %v437 = vpop.xlane.xlu0 %436
    %v438 = vlog2.pop %v437
    %v439 = vmul.f32 %v438, 0.6931472
    %v440 = vsub.f32 %v433, %v439
    %441 = vst [vmem:[#allocation12] sm:$0xff] %v440
    // Predicated region
    $region42: #{tpu_custom_call.1} parent=1 // pred_check
      %p442 = pneg %p73
    $region43: #{tpu_custom_call.1} parent=1 // pred_check_branch
      %444 = sbr.rel (%p442) target = $region45
    $region44: #{tpu_custom_call.1} parent=1 // pred_region
      %v445 = vld [vmem:[#allocation2] sm:$0xff]
      %446 = vst [vmem:[#allocation13] sm:$0xff] %v445
    $region45: #{tpu_custom_call.1} parent=1 // pred_fallthru
      _
    // Predicated region
    $region46: #{tpu_custom_call.1} parent=1 // pred_check
      _
    $region47: #{tpu_custom_call.1} parent=1 // pred_check_branch
      %448 = sbr.rel (0) target = $region49
    $region48: #{tpu_custom_call.1} parent=1 // pred_region
      %s450 = ssub.s32 128, 128
      %451 = vsyncadd [#allocation6], %s450
      %s453 = sshll.u32 [#allocation12], 4
      %s454 = int_to_ptr.vmem [resolvable:$true] %s453
      %456 = dma.vmem_to_hbm [thread:$0]  %s454, 128, %s5, [#allocation6]
    $region49: #{tpu_custom_call.1} parent=1 // pred_fallthru
      _
    // Predicated region
    $region50: #{tpu_custom_call.1} parent=1 // pred_check
      _
    $region51: #{tpu_custom_call.1} parent=1 // pred_check_branch
      %458 = sbr.rel (0) target = $region53
    $region52: #{tpu_custom_call.1} parent=1 // pred_region
      %s460 = ssub.s32 128, 128
      %461 = vsyncadd [#allocation14], %s460
      %s463 = sshll.u32 [#allocation13], 4
      %s464 = int_to_ptr.vmem [resolvable:$true] %s463
      %466 = dma.vmem_to_hbm [thread:$0]  %s464, 128, %s6, [#allocation14]
    $region53: #{tpu_custom_call.1} parent=1 // pred_fallthru
      _
    // Predicated region
    $region54: #{tpu_custom_call.1} parent=1 // pred_check
      _
    $region55: #{tpu_custom_call.1} parent=1 // pred_check_branch
      %468 = sbr.rel (0) target = $region57
    $region56: #{tpu_custom_call.1} parent=1 // pred_region
      %469 = dma.done [#allocation6], 128
    $region57: #{tpu_custom_call.1} parent=1 // pred_fallthru
      _
    // Predicated region
    $region58: #{tpu_custom_call.1} parent=1 // pred_check
      _
    $region59: #{tpu_custom_call.1} parent=1 // pred_check_branch
      %471 = sbr.rel (0) target = $region61
    $region60: #{tpu_custom_call.1} parent=1 // pred_region
      %472 = dma.done [#allocation14], 128
    $region61: #{tpu_custom_call.1} parent=1 // pred_fallthru
      _
    %473 = vsyncpa [#allocation5], 1
    %474 = vsyncpa [#allocation8], 1
    %475 = vsyncpa [#allocation11], 1
    %476 = vsyncpa [#allocation6], 1
    %477 = vsyncpa [#allocation14], 1

</llo_original>
